<compile_context>
chip_gen: v5e
topology: v5e:2x2
jax: 0.10.0
libtpu: 0.0.40
codegen_flags: <defaults>
</compile_context>

<pallas_src>
import functools

import jax
import jax.numpy as jnp
import numpy as np
from jax.experimental import pallas as pl
from jax.experimental.pallas import tpu as pltpu


def _round_up(x, m):
    return ((x + m - 1) // m) * m


def decoder_rnn_kernel(x_ref, h0_ref, wih_ref, whh_ref, bih_ref, bhh_ref,
                       wout_ref, bout_ref, hout_ref, logp_ref, ix_ref, seq_ref,
                       *, n_layers, seq_len, batch, hidden):
    S, B, H = seq_len, batch, hidden
    Gp = bih_ref.shape[1]

    whh = whh_ref[...]                                    # (H, Gp) bf16, kept resident
    bhh = jnp.broadcast_to(bhh_ref[...], (B, Gp))         # hoisted broadcast (not per step)
    h = h0_ref[...]                                       # (B, H) f32
    o0 = h                                                # final-layer output at t=0

    for layer in range(n_layers):                         # static layer loop (same weights,
        xl = x_ref[...] if layer == 0 else seq_ref[...]   #  as in the torch module's for-loop)
        # F.relu on the layer input, then the input projection for ALL timesteps at once
        # (hoisted off the serial recurrence path).
        xr = jnp.maximum(xl, 0.0).astype(jnp.bfloat16)    # (S*B, H)
        ix_ref[...] = (jnp.dot(xr, wih_ref[...],
                               preferred_element_type=jnp.float32) + bih_ref[...])

        last = layer == n_layers - 1
        for t in range(S):                                # static unroll: S is small
            ixt = ix_ref[pl.ds(t * B, B), :]              # (B, Gp) precomputed input gates
            hx = jnp.dot(h.astype(jnp.bfloat16), whh,
                         preferred_element_type=jnp.float32) + bhh
            # PyTorch GRU gate order (r, z, n):
            r = jax.nn.sigmoid(ixt[:, 0:H] + hx[:, 0:H])
            z = jax.nn.sigmoid(ixt[:, H:2 * H] + hx[:, H:2 * H])
            n = jnp.tanh(ixt[:, 2 * H:3 * H] + r * hx[:, 2 * H:3 * H])
            h = (1.0 - z) * n + z * h
            if last and t == 0:
                o0 = h                                    # keep output[0] in the carry
            if not last:
                seq_ref[pl.ds(t * B, B), :] = h           # feed the next layer (VMEM only)

    hout_ref[...] = h

    # TODO(synk): the torch module calls print('output[0]', output[0]); debug print omitted.

    # self.softmax(self.out(output[0])) -- padded vocab columns carry bias -1e30 so they
    # contribute nothing to the (max-shifted, stable) log-softmax.
    logits = (jnp.dot(o0.astype(jnp.bfloat16), wout_ref[...],
                      preferred_element_type=jnp.float32) + bout_ref[...])
    m = jnp.max(logits, axis=-1, keepdims=True)
    lse = jnp.log(jnp.sum(jnp.exp(logits - m), axis=-1, keepdims=True)) + m
    logp_ref[...] = logits - lse


def init_params(key, hidden_size, output_size):
    ks = jax.random.split(key, 7)
    std = 1.0 / np.sqrt(hidden_size)
    f32 = jnp.float32
    return {
        "embedding": jax.random.normal(ks[0], (output_size, hidden_size), f32),
        "w_ih": jax.random.uniform(ks[1], (3, hidden_size, hidden_size), f32, -std, std),
        "w_hh": jax.random.uniform(ks[2], (3, hidden_size, hidden_size), f32, -std, std),
        "b_ih": jax.random.uniform(ks[3], (3, 1, hidden_size), f32, -std, std),
        "b_hh": jax.random.uniform(ks[4], (3, 1, hidden_size), f32, -std, std),
        "w_out": jax.random.uniform(ks[5], (hidden_size, output_size), f32, -std, std),
        "b_out": jax.random.uniform(ks[6], (1, output_size), f32, -std, std),
    }


def decoder_rnn_forward(params, input_ids, hidden, n_layers=1):
    """input_ids: (B, S) int32, hidden: (1, B, H) f32. Returns (logp (B,V), hidden (1,B,H))."""
    H, V = params["w_out"].shape
    B, S = input_ids.shape
    G = 3 * H
    Gp = _round_up(G, 128)
    Vp = _round_up(V, 128)

    # ---- wrapper-side parameter fusion / padding (glue, tiny) ----
    wih_cat = jnp.concatenate([params["w_ih"][g] for g in range(3)], axis=1)   # (H, 3H)
    whh_cat = jnp.concatenate([params["w_hh"][g] for g in range(3)], axis=1)   # (H, 3H)
    # fold b_hh for the r,z gates into the input-side bias; keep b_hh_n on the hidden side
    bih_cat = jnp.concatenate([params["b_ih"][0] + params["b_hh"][0],
                               params["b_ih"][1] + params["b_hh"][1],
                               params["b_ih"][2]], axis=1)                     # (1, 3H)
    bhh_cat = jnp.concatenate([jnp.zeros_like(params["b_hh"][0]),
                               jnp.zeros_like(params["b_hh"][1]),
                               params["b_hh"][2]], axis=1)                     # (1, 3H)

    pad_g = [(0, 0), (0, Gp - G)]
    wih_p = jnp.pad(wih_cat, pad_g).astype(jnp.bfloat16)
    whh_p = jnp.pad(whh_cat, pad_g).astype(jnp.bfloat16)
    bih_p = jnp.pad(bih_cat, pad_g).astype(jnp.float32)
    bhh_p = jnp.pad(bhh_cat, pad_g).astype(jnp.float32)
    wout_p = jnp.pad(params["w_out"], [(0, 0), (0, Vp - V)]).astype(jnp.bfloat16)
    bout_p = jnp.pad(params["b_out"], [(0, 0), (0, Vp - V)],
                     constant_values=-1e30).astype(jnp.float32)

    # ---- input prep: embedding lookup + permute(1, 0, 2), flattened to (S*B, H) ----
    emb = params["embedding"][input_ids]                       # (B, S, H)
    x = jnp.transpose(emb, (1, 0, 2)).reshape(S * B, H).astype(jnp.float32)
    h0 = hidden[0].astype(jnp.float32)                         # (B, H)

    kernel = functools.partial(decoder_rnn_kernel, n_layers=n_layers,
                               seq_len=S, batch=B, hidden=H)
    vmem = pl.BlockSpec(memory_space=pltpu.MemorySpace.VMEM)
    hout, logp_p = pl.pallas_call(
        kernel,
        out_shape=(jax.ShapeDtypeStruct((B, H), jnp.float32),
                   jax.ShapeDtypeStruct((B, Vp), jnp.float32)),
        in_specs=[vmem] * 8,
        out_specs=(vmem, vmem),
        scratch_shapes=[pltpu.VMEM((S * B, Gp), jnp.float32),   # hoisted input projection
                        pltpu.VMEM((S * B, H), jnp.float32)],   # inter-layer sequence ping-pong
    )(x, h0, wih_p, whh_p, bih_p, bhh_p, wout_p, bout_p)

    return logp_p[:, :V], hout[None]                            # hidden back to (1, B, H)


def _reference_forward(params, input_ids, hidden, n_layers=1):
    """Pure-JAX f32 reference replicating the PyTorch forward semantics."""
    x = jnp.transpose(params["embedding"][input_ids], (1, 0, 2))
    h = hidden[0]

    def gru_step(x_t, h):
        gi = [x_t @ params["w_ih"][g] + params["b_ih"][g] for g in range(3)]
        gh = [h @ params["w_hh"][g] + params["b_hh"][g] for g in range(3)]
        r = jax.nn.sigmoid(gi[0] + gh[0])
        z = jax.nn.sigmoid(gi[1] + gh[1])
        n = jnp.tanh(gi[2] + r * gh[2])
        return (1.0 - z) * n + z * h

    for _ in range(n_layers):
        xr = jnp.maximum(x, 0.0)
        outs = []
        for t in range(x.shape[0]):
            h = gru_step(xr[t], h)
            outs.append(h)
        x = jnp.stack(outs, axis=0)
    logits = x[0] @ params["w_out"] + params["b_out"]
    logp = logits - jax.nn.logsumexp(logits, axis=-1, keepdims=True)
    return logp, h[None]


if __name__ == "__main__":
    key = jax.random.PRNGKey(0)
    hidden_size, output_size = 32, 64
    batch, seq = 2, 8

    pkey, ikey = jax.random.split(key)
    params = init_params(pkey, hidden_size, output_size)
    input_ids = jax.random.randint(ikey, (batch, seq), 0, output_size, jnp.int32)
    hidden0 = jnp.zeros((1, batch, hidden_size), jnp.float32)

    # n_layers = 1 (the default / faithful path)
    logp, h_out = decoder_rnn_forward(params, input_ids, hidden0, n_layers=1)
    jax.block_until_ready((logp, h_out))
    ref_logp, ref_h = _reference_forward(params, input_ids, hidden0, n_layers=1)
    # Tolerances are loose because the kernel uses bf16 MXU operands (f32 accumulation)
    # while the reference is pure f32.
    np.testing.assert_allclose(np.asarray(logp), np.asarray(ref_logp), rtol=5e-2, atol=5e-2)
    np.testing.assert_allclose(np.asarray(h_out), np.asarray(ref_h), rtol=5e-2, atol=5e-2)

    # n_layers = 2: exercises the fused in-kernel layer loop (same GRU re-applied with
    # ReLU in between, hidden carried, exactly like the torch module's Python loop).
    logp2, h_out2 = decoder_rnn_forward(params, input_ids, hidden0, n_layers=2)
    jax.block_until_ready((logp2, h_out2))
    ref_logp2, ref_h2 = _reference_forward(params, input_ids, hidden0, n_layers=2)
    np.testing.assert_allclose(np.asarray(logp2), np.asarray(ref_logp2), rtol=1e-1, atol=1e-1)
    np.testing.assert_allclose(np.asarray(h_out2), np.asarray(ref_h2), rtol=1e-1, atol=1e-1)

    print("KERNEL_OK")
</pallas_src>

<mosaic_0001>
module attributes {stable_mosaic.version = 11 : i64} {
  func.func @decoder_rnn_kernel(%arg0: memref<16x32xf32, #tpu.memory_space<vmem>>, %arg1: memref<2x32xf32, #tpu.memory_space<vmem>>, %arg2: memref<32x128xbf16, #tpu.memory_space<vmem>>, %arg3: memref<32x128xbf16, #tpu.memory_space<vmem>>, %arg4: memref<1x128xf32, #tpu.memory_space<vmem>>, %arg5: memref<1x128xf32, #tpu.memory_space<vmem>>, %arg6: memref<32x128xbf16, #tpu.memory_space<vmem>>, %arg7: memref<1x128xf32, #tpu.memory_space<vmem>>, %arg8: memref<2x32xf32, #tpu.memory_space<vmem>>, %arg9: memref<2x128xf32, #tpu.memory_space<vmem>>, %arg10: memref<16x128xf32, #tpu.memory_space<vmem>>, %arg11: memref<16x32xf32, #tpu.memory_space<vmem>>) attributes {dimension_semantics = [], scalar_prefetch = 0 : i64, scratch_operands = 2 : i64, tpu.core_type = #tpu.core_type<tc>} {
    %c0 = arith.constant 0 : index
    %c0_0 = arith.constant 0 : index
    %0 = vector.load %arg3[%c0, %c0_0] : memref<32x128xbf16, #tpu.memory_space<vmem>>, vector<32x128xbf16>
    %c0_1 = arith.constant 0 : index
    %c0_2 = arith.constant 0 : index
    %1 = vector.load %arg5[%c0_1, %c0_2] : memref<1x128xf32, #tpu.memory_space<vmem>>, vector<1x128xf32>
    %2 = vector.shape_cast %1 : vector<1x128xf32> to vector<1x128xf32>
    %3 = vector.broadcast %2 : vector<1x128xf32> to vector<2x128xf32>
    %c0_3 = arith.constant 0 : index
    %c0_4 = arith.constant 0 : index
    %4 = vector.load %arg1[%c0_3, %c0_4] : memref<2x32xf32, #tpu.memory_space<vmem>>, vector<2x32xf32>
    %c0_5 = arith.constant 0 : index
    %c0_6 = arith.constant 0 : index
    %5 = vector.load %arg0[%c0_5, %c0_6] : memref<16x32xf32, #tpu.memory_space<vmem>>, vector<16x32xf32>
    %cst = arith.constant 0.000000e+00 : f32
    %6 = vector.broadcast %cst : f32 to vector<16x32xf32>
    %7 = arith.maximumf %5, %6 : vector<16x32xf32>
    %8 = arith.truncf %7 : vector<16x32xf32> to vector<16x32xbf16>
    %c0_7 = arith.constant 0 : index
    %c0_8 = arith.constant 0 : index
    %9 = vector.load %arg2[%c0_7, %c0_8] : memref<32x128xbf16, #tpu.memory_space<vmem>>, vector<32x128xbf16>
    %cst_9 = arith.constant dense<0.000000e+00> : vector<16x128xf32>
    %10 = tpu.matmul %8, %9, %cst_9 {dimension_numbers = #tpu.dot_dimension_numbers<[1], [0], [0], [1], [0, 0, 1, 1], [], []>} : vector<16x32xbf16>, vector<32x128xbf16>, vector<16x128xf32> -> vector<16x128xf32>
    %c0_10 = arith.constant 0 : index
    %c0_11 = arith.constant 0 : index
    %11 = vector.load %arg4[%c0_10, %c0_11] : memref<1x128xf32, #tpu.memory_space<vmem>>, vector<1x128xf32>
    %12 = vector.broadcast %11 : vector<1x128xf32> to vector<16x128xf32>
    %13 = arith.addf %10, %12 : vector<16x128xf32>
    %c0_12 = arith.constant 0 : index
    %c0_13 = arith.constant 0 : index
    %14 = vector.load %arg10[%c0_12, %c0_13] : memref<16x128xf32, #tpu.memory_space<vmem>>, vector<16x128xf32>
    tpu.vector_store %arg10[%c0_12, %c0_13], %13 {strides = array<i32>} : memref<16x128xf32, #tpu.memory_space<vmem>>, vector<16x128xf32>,
    %c0_14 = arith.constant 0 : index
    %c0_15 = arith.constant 0 : index
    %15 = vector.load %arg10[%c0_14, %c0_15] : memref<16x128xf32, #tpu.memory_space<vmem>>, vector<2x128xf32>
    %16 = arith.truncf %4 : vector<2x32xf32> to vector<2x32xbf16>
    %cst_16 = arith.constant dense<0.000000e+00> : vector<2x128xf32>
    %17 = tpu.matmul %16, %0, %cst_16 {dimension_numbers = #tpu.dot_dimension_numbers<[1], [0], [0], [1], [0, 0, 1, 1], [], []>} : vector<2x32xbf16>, vector<32x128xbf16>, vector<2x128xf32> -> vector<2x128xf32>
    %18 = arith.addf %17, %3 : vector<2x128xf32>
    %19 = vector.extract_strided_slice %15 {offsets = [0, 0], sizes = [2, 32], strides = [1, 1]} : vector<2x128xf32> to vector<2x32xf32>
    %20 = vector.extract_strided_slice %18 {offsets = [0, 0], sizes = [2, 32], strides = [1, 1]} : vector<2x128xf32> to vector<2x32xf32>
    %21 = arith.addf %19, %20 : vector<2x32xf32>
    %22 = arith.negf %21 : vector<2x32xf32>
    %23 = math.exp %22 : vector<2x32xf32>
    %cst_17 = arith.constant 1.000000e+00 : f32
    %24 = vector.broadcast %cst_17 : f32 to vector<2x32xf32>
    %25 = arith.addf %24, %23 : vector<2x32xf32>
    %26 = arith.divf %24, %25 : vector<2x32xf32>
    %27 = vector.extract_strided_slice %15 {offsets = [0, 32], sizes = [2, 32], strides = [1, 1]} : vector<2x128xf32> to vector<2x32xf32>
    %28 = vector.extract_strided_slice %18 {offsets = [0, 32], sizes = [2, 32], strides = [1, 1]} : vector<2x128xf32> to vector<2x32xf32>
    %29 = arith.addf %27, %28 : vector<2x32xf32>
    %30 = arith.negf %29 : vector<2x32xf32>
    %31 = math.exp %30 : vector<2x32xf32>
    %cst_18 = arith.constant 1.000000e+00 : f32
    %32 = vector.broadcast %cst_18 : f32 to vector<2x32xf32>
    %33 = arith.addf %32, %31 : vector<2x32xf32>
    %34 = arith.divf %32, %33 : vector<2x32xf32>
    %35 = vector.extract_strided_slice %15 {offsets = [0, 64], sizes = [2, 32], strides = [1, 1]} : vector<2x128xf32> to vector<2x32xf32>
    %36 = vector.extract_strided_slice %18 {offsets = [0, 64], sizes = [2, 32], strides = [1, 1]} : vector<2x128xf32> to vector<2x32xf32>
    %37 = arith.mulf %26, %36 : vector<2x32xf32>
    %38 = arith.addf %35, %37 : vector<2x32xf32>
    %39 = math.tanh %38 : vector<2x32xf32>
    %cst_19 = arith.constant 1.000000e+00 : f32
    %40 = vector.broadcast %cst_19 : f32 to vector<2x32xf32>
    %41 = arith.subf %40, %34 : vector<2x32xf32>
    %42 = arith.mulf %41, %39 : vector<2x32xf32>
    %43 = arith.mulf %34, %4 : vector<2x32xf32>
    %44 = arith.addf %42, %43 : vector<2x32xf32>
    %c2 = arith.constant 2 : index
    %c0_20 = arith.constant 0 : index
    %45 = vector.load %arg10[%c2, %c0_20] : memref<16x128xf32, #tpu.memory_space<vmem>>, vector<2x128xf32>
    %46 = arith.truncf %44 : vector<2x32xf32> to vector<2x32xbf16>
    %cst_21 = arith.constant dense<0.000000e+00> : vector<2x128xf32>
    %47 = tpu.matmul %46, %0, %cst_21 {dimension_numbers = #tpu.dot_dimension_numbers<[1], [0], [0], [1], [0, 0, 1, 1], [], []>} : vector<2x32xbf16>, vector<32x128xbf16>, vector<2x128xf32> -> vector<2x128xf32>
    %48 = arith.addf %47, %3 : vector<2x128xf32>
    %49 = vector.extract_strided_slice %45 {offsets = [0, 0], sizes = [2, 32], strides = [1, 1]} : vector<2x128xf32> to vector<2x32xf32>
    %50 = vector.extract_strided_slice %48 {offsets = [0, 0], sizes = [2, 32], strides = [1, 1]} : vector<2x128xf32> to vector<2x32xf32>
    %51 = arith.addf %49, %50 : vector<2x32xf32>
    %52 = arith.negf %51 : vector<2x32xf32>
    %53 = math.exp %52 : vector<2x32xf32>
    %cst_22 = arith.constant 1.000000e+00 : f32
    %54 = vector.broadcast %cst_22 : f32 to vector<2x32xf32>
    %55 = arith.addf %54, %53 : vector<2x32xf32>
    %56 = arith.divf %54, %55 : vector<2x32xf32>
    %57 = vector.extract_strided_slice %45 {offsets = [0, 32], sizes = [2, 32], strides = [1, 1]} : vector<2x128xf32> to vector<2x32xf32>
    %58 = vector.extract_strided_slice %48 {offsets = [0, 32], sizes = [2, 32], strides = [1, 1]} : vector<2x128xf32> to vector<2x32xf32>
    %59 = arith.addf %57, %58 : vector<2x32xf32>
    %60 = arith.negf %59 : vector<2x32xf32>
    %61 = math.exp %60 : vector<2x32xf32>
    %cst_23 = arith.constant 1.000000e+00 : f32
    %62 = vector.broadcast %cst_23 : f32 to vector<2x32xf32>
    %63 = arith.addf %62, %61 : vector<2x32xf32>
    %64 = arith.divf %62, %63 : vector<2x32xf32>
    %65 = vector.extract_strided_slice %45 {offsets = [0, 64], sizes = [2, 32], strides = [1, 1]} : vector<2x128xf32> to vector<2x32xf32>
    %66 = vector.extract_strided_slice %48 {offsets = [0, 64], sizes = [2, 32], strides = [1, 1]} : vector<2x128xf32> to vector<2x32xf32>
    %67 = arith.mulf %56, %66 : vector<2x32xf32>
    %68 = arith.addf %65, %67 : vector<2x32xf32>
    %69 = math.tanh %68 : vector<2x32xf32>
    %cst_24 = arith.constant 1.000000e+00 : f32
    %70 = vector.broadcast %cst_24 : f32 to vector<2x32xf32>
    %71 = arith.subf %70, %64 : vector<2x32xf32>
    %72 = arith.mulf %71, %69 : vector<2x32xf32>
    %73 = arith.mulf %64, %44 : vector<2x32xf32>
    %74 = arith.addf %72, %73 : vector<2x32xf32>
    %c4 = arith.constant 4 : index
    %c0_25 = arith.constant 0 : index
    %75 = vector.load %arg10[%c4, %c0_25] : memref<16x128xf32, #tpu.memory_space<vmem>>, vector<2x128xf32>
    %76 = arith.truncf %74 : vector<2x32xf32> to vector<2x32xbf16>
    %cst_26 = arith.constant dense<0.000000e+00> : vector<2x128xf32>
    %77 = tpu.matmul %76, %0, %cst_26 {dimension_numbers = #tpu.dot_dimension_numbers<[1], [0], [0], [1], [0, 0, 1, 1], [], []>} : vector<2x32xbf16>, vector<32x128xbf16>, vector<2x128xf32> -> vector<2x128xf32>
    %78 = arith.addf %77, %3 : vector<2x128xf32>
    %79 = vector.extract_strided_slice %75 {offsets = [0, 0], sizes = [2, 32], strides = [1, 1]} : vector<2x128xf32> to vector<2x32xf32>
    %80 = vector.extract_strided_slice %78 {offsets = [0, 0], sizes = [2, 32], strides = [1, 1]} : vector<2x128xf32> to vector<2x32xf32>
    %81 = arith.addf %79, %80 : vector<2x32xf32>
    %82 = arith.negf %81 : vector<2x32xf32>
    %83 = math.exp %82 : vector<2x32xf32>
    %cst_27 = arith.constant 1.000000e+00 : f32
    %84 = vector.broadcast %cst_27 : f32 to vector<2x32xf32>
    %85 = arith.addf %84, %83 : vector<2x32xf32>
    %86 = arith.divf %84, %85 : vector<2x32xf32>
    %87 = vector.extract_strided_slice %75 {offsets = [0, 32], sizes = [2, 32], strides = [1, 1]} : vector<2x128xf32> to vector<2x32xf32>
    %88 = vector.extract_strided_slice %78 {offsets = [0, 32], sizes = [2, 32], strides = [1, 1]} : vector<2x128xf32> to vector<2x32xf32>
    %89 = arith.addf %87, %88 : vector<2x32xf32>
    %90 = arith.negf %89 : vector<2x32xf32>
    %91 = math.exp %90 : vector<2x32xf32>
    %cst_28 = arith.constant 1.000000e+00 : f32
    %92 = vector.broadcast %cst_28 : f32 to vector<2x32xf32>
    %93 = arith.addf %92, %91 : vector<2x32xf32>
    %94 = arith.divf %92, %93 : vector<2x32xf32>
    %95 = vector.extract_strided_slice %75 {offsets = [0, 64], sizes = [2, 32], strides = [1, 1]} : vector<2x128xf32> to vector<2x32xf32>
    %96 = vector.extract_strided_slice %78 {offsets = [0, 64], sizes = [2, 32], strides = [1, 1]} : vector<2x128xf32> to vector<2x32xf32>
    %97 = arith.mulf %86, %96 : vector<2x32xf32>
    %98 = arith.addf %95, %97 : vector<2x32xf32>
    %99 = math.tanh %98 : vector<2x32xf32>
    %cst_29 = arith.constant 1.000000e+00 : f32
    %100 = vector.broadcast %cst_29 : f32 to vector<2x32xf32>
    %101 = arith.subf %100, %94 : vector<2x32xf32>
    %102 = arith.mulf %101, %99 : vector<2x32xf32>
    %103 = arith.mulf %94, %74 : vector<2x32xf32>
    %104 = arith.addf %102, %103 : vector<2x32xf32>
    %c6 = arith.constant 6 : index
    %c0_30 = arith.constant 0 : index
    %105 = vector.load %arg10[%c6, %c0_30] : memref<16x128xf32, #tpu.memory_space<vmem>>, vector<2x128xf32>
    %106 = arith.truncf %104 : vector<2x32xf32> to vector<2x32xbf16>
    %cst_31 = arith.constant dense<0.000000e+00> : vector<2x128xf32>
    %107 = tpu.matmul %106, %0, %cst_31 {dimension_numbers = #tpu.dot_dimension_numbers<[1], [0], [0], [1], [0, 0, 1, 1], [], []>} : vector<2x32xbf16>, vector<32x128xbf16>, vector<2x128xf32> -> vector<2x128xf32>
    %108 = arith.addf %107, %3 : vector<2x128xf32>
    %109 = vector.extract_strided_slice %105 {offsets = [0, 0], sizes = [2, 32], strides = [1, 1]} : vector<2x128xf32> to vector<2x32xf32>
    %110 = vector.extract_strided_slice %108 {offsets = [0, 0], sizes = [2, 32], strides = [1, 1]} : vector<2x128xf32> to vector<2x32xf32>
    %111 = arith.addf %109, %110 : vector<2x32xf32>
    %112 = arith.negf %111 : vector<2x32xf32>
    %113 = math.exp %112 : vector<2x32xf32>
    %cst_32 = arith.constant 1.000000e+00 : f32
    %114 = vector.broadcast %cst_32 : f32 to vector<2x32xf32>
    %115 = arith.addf %114, %113 : vector<2x32xf32>
    %116 = arith.divf %114, %115 : vector<2x32xf32>
    %117 = vector.extract_strided_slice %105 {offsets = [0, 32], sizes = [2, 32], strides = [1, 1]} : vector<2x128xf32> to vector<2x32xf32>
    %118 = vector.extract_strided_slice %108 {offsets = [0, 32], sizes = [2, 32], strides = [1, 1]} : vector<2x128xf32> to vector<2x32xf32>
    %119 = arith.addf %117, %118 : vector<2x32xf32>
    %120 = arith.negf %119 : vector<2x32xf32>
    %121 = math.exp %120 : vector<2x32xf32>
    %cst_33 = arith.constant 1.000000e+00 : f32
    %122 = vector.broadcast %cst_33 : f32 to vector<2x32xf32>
    %123 = arith.addf %122, %121 : vector<2x32xf32>
    %124 = arith.divf %122, %123 : vector<2x32xf32>
    %125 = vector.extract_strided_slice %105 {offsets = [0, 64], sizes = [2, 32], strides = [1, 1]} : vector<2x128xf32> to vector<2x32xf32>
    %126 = vector.extract_strided_slice %108 {offsets = [0, 64], sizes = [2, 32], strides = [1, 1]} : vector<2x128xf32> to vector<2x32xf32>
    %127 = arith.mulf %116, %126 : vector<2x32xf32>
    %128 = arith.addf %125, %127 : vector<2x32xf32>
    %129 = math.tanh %128 : vector<2x32xf32>
    %cst_34 = arith.constant 1.000000e+00 : f32
    %130 = vector.broadcast %cst_34 : f32 to vector<2x32xf32>
    %131 = arith.subf %130, %124 : vector<2x32xf32>
    %132 = arith.mulf %131, %129 : vector<2x32xf32>
    %133 = arith.mulf %124, %104 : vector<2x32xf32>
    %134 = arith.addf %132, %133 : vector<2x32xf32>
    %c8 = arith.constant 8 : index
    %c0_35 = arith.constant 0 : index
    %135 = vector.load %arg10[%c8, %c0_35] : memref<16x128xf32, #tpu.memory_space<vmem>>, vector<2x128xf32>
    %136 = arith.truncf %134 : vector<2x32xf32> to vector<2x32xbf16>
    %cst_36 = arith.constant dense<0.000000e+00> : vector<2x128xf32>
    %137 = tpu.matmul %136, %0, %cst_36 {dimension_numbers = #tpu.dot_dimension_numbers<[1], [0], [0], [1], [0, 0, 1, 1], [], []>} : vector<2x32xbf16>, vector<32x128xbf16>, vector<2x128xf32> -> vector<2x128xf32>
    %138 = arith.addf %137, %3 : vector<2x128xf32>
    %139 = vector.extract_strided_slice %135 {offsets = [0, 0], sizes = [2, 32], strides = [1, 1]} : vector<2x128xf32> to vector<2x32xf32>
    %140 = vector.extract_strided_slice %138 {offsets = [0, 0], sizes = [2, 32], strides = [1, 1]} : vector<2x128xf32> to vector<2x32xf32>
    %141 = arith.addf %139, %140 : vector<2x32xf32>
    %142 = arith.negf %141 : vector<2x32xf32>
    %143 = math.exp %142 : vector<2x32xf32>
    %cst_37 = arith.constant 1.000000e+00 : f32
    %144 = vector.broadcast %cst_37 : f32 to vector<2x32xf32>
    %145 = arith.addf %144, %143 : vector<2x32xf32>
    %146 = arith.divf %144, %145 : vector<2x32xf32>
    %147 = vector.extract_strided_slice %135 {offsets = [0, 32], sizes = [2, 32], strides = [1, 1]} : vector<2x128xf32> to vector<2x32xf32>
    %148 = vector.extract_strided_slice %138 {offsets = [0, 32], sizes = [2, 32], strides = [1, 1]} : vector<2x128xf32> to vector<2x32xf32>
    %149 = arith.addf %147, %148 : vector<2x32xf32>
    %150 = arith.negf %149 : vector<2x32xf32>
    %151 = math.exp %150 : vector<2x32xf32>
    %cst_38 = arith.constant 1.000000e+00 : f32
    %152 = vector.broadcast %cst_38 : f32 to vector<2x32xf32>
    %153 = arith.addf %152, %151 : vector<2x32xf32>
    %154 = arith.divf %152, %153 : vector<2x32xf32>
    %155 = vector.extract_strided_slice %135 {offsets = [0, 64], sizes = [2, 32], strides = [1, 1]} : vector<2x128xf32> to vector<2x32xf32>
    %156 = vector.extract_strided_slice %138 {offsets = [0, 64], sizes = [2, 32], strides = [1, 1]} : vector<2x128xf32> to vector<2x32xf32>
    %157 = arith.mulf %146, %156 : vector<2x32xf32>
    %158 = arith.addf %155, %157 : vector<2x32xf32>
    %159 = math.tanh %158 : vector<2x32xf32>
    %cst_39 = arith.constant 1.000000e+00 : f32
    %160 = vector.broadcast %cst_39 : f32 to vector<2x32xf32>
    %161 = arith.subf %160, %154 : vector<2x32xf32>
    %162 = arith.mulf %161, %159 : vector<2x32xf32>
    %163 = arith.mulf %154, %134 : vector<2x32xf32>
    %164 = arith.addf %162, %163 : vector<2x32xf32>
    %c10 = arith.constant 10 : index
    %c0_40 = arith.constant 0 : index
    %165 = vector.load %arg10[%c10, %c0_40] : memref<16x128xf32, #tpu.memory_space<vmem>>, vector<2x128xf32>
    %166 = arith.truncf %164 : vector<2x32xf32> to vector<2x32xbf16>
    %cst_41 = arith.constant dense<0.000000e+00> : vector<2x128xf32>
    %167 = tpu.matmul %166, %0, %cst_41 {dimension_numbers = #tpu.dot_dimension_numbers<[1], [0], [0], [1], [0, 0, 1, 1], [], []>} : vector<2x32xbf16>, vector<32x128xbf16>, vector<2x128xf32> -> vector<2x128xf32>
    %168 = arith.addf %167, %3 : vector<2x128xf32>
    %169 = vector.extract_strided_slice %165 {offsets = [0, 0], sizes = [2, 32], strides = [1, 1]} : vector<2x128xf32> to vector<2x32xf32>
    %170 = vector.extract_strided_slice %168 {offsets = [0, 0], sizes = [2, 32], strides = [1, 1]} : vector<2x128xf32> to vector<2x32xf32>
    %171 = arith.addf %169, %170 : vector<2x32xf32>
    %172 = arith.negf %171 : vector<2x32xf32>
    %173 = math.exp %172 : vector<2x32xf32>
    %cst_42 = arith.constant 1.000000e+00 : f32
    %174 = vector.broadcast %cst_42 : f32 to vector<2x32xf32>
    %175 = arith.addf %174, %173 : vector<2x32xf32>
    %176 = arith.divf %174, %175 : vector<2x32xf32>
    %177 = vector.extract_strided_slice %165 {offsets = [0, 32], sizes = [2, 32], strides = [1, 1]} : vector<2x128xf32> to vector<2x32xf32>
    %178 = vector.extract_strided_slice %168 {offsets = [0, 32], sizes = [2, 32], strides = [1, 1]} : vector<2x128xf32> to vector<2x32xf32>
    %179 = arith.addf %177, %178 : vector<2x32xf32>
    %180 = arith.negf %179 : vector<2x32xf32>
    %181 = math.exp %180 : vector<2x32xf32>
    %cst_43 = arith.constant 1.000000e+00 : f32
    %182 = vector.broadcast %cst_43 : f32 to vector<2x32xf32>
    %183 = arith.addf %182, %181 : vector<2x32xf32>
    %184 = arith.divf %182, %183 : vector<2x32xf32>
    %185 = vector.extract_strided_slice %165 {offsets = [0, 64], sizes = [2, 32], strides = [1, 1]} : vector<2x128xf32> to vector<2x32xf32>
    %186 = vector.extract_strided_slice %168 {offsets = [0, 64], sizes = [2, 32], strides = [1, 1]} : vector<2x128xf32> to vector<2x32xf32>
    %187 = arith.mulf %176, %186 : vector<2x32xf32>
    %188 = arith.addf %185, %187 : vector<2x32xf32>
    %189 = math.tanh %188 : vector<2x32xf32>
    %cst_44 = arith.constant 1.000000e+00 : f32
    %190 = vector.broadcast %cst_44 : f32 to vector<2x32xf32>
    %191 = arith.subf %190, %184 : vector<2x32xf32>
    %192 = arith.mulf %191, %189 : vector<2x32xf32>
    %193 = arith.mulf %184, %164 : vector<2x32xf32>
    %194 = arith.addf %192, %193 : vector<2x32xf32>
    %c12 = arith.constant 12 : index
    %c0_45 = arith.constant 0 : index
    %195 = vector.load %arg10[%c12, %c0_45] : memref<16x128xf32, #tpu.memory_space<vmem>>, vector<2x128xf32>
    %196 = arith.truncf %194 : vector<2x32xf32> to vector<2x32xbf16>
    %cst_46 = arith.constant dense<0.000000e+00> : vector<2x128xf32>
    %197 = tpu.matmul %196, %0, %cst_46 {dimension_numbers = #tpu.dot_dimension_numbers<[1], [0], [0], [1], [0, 0, 1, 1], [], []>} : vector<2x32xbf16>, vector<32x128xbf16>, vector<2x128xf32> -> vector<2x128xf32>
    %198 = arith.addf %197, %3 : vector<2x128xf32>
    %199 = vector.extract_strided_slice %195 {offsets = [0, 0], sizes = [2, 32], strides = [1, 1]} : vector<2x128xf32> to vector<2x32xf32>
    %200 = vector.extract_strided_slice %198 {offsets = [0, 0], sizes = [2, 32], strides = [1, 1]} : vector<2x128xf32> to vector<2x32xf32>
    %201 = arith.addf %199, %200 : vector<2x32xf32>
    %202 = arith.negf %201 : vector<2x32xf32>
    %203 = math.exp %202 : vector<2x32xf32>
    %cst_47 = arith.constant 1.000000e+00 : f32
    %204 = vector.broadcast %cst_47 : f32 to vector<2x32xf32>
    %205 = arith.addf %204, %203 : vector<2x32xf32>
    %206 = arith.divf %204, %205 : vector<2x32xf32>
    %207 = vector.extract_strided_slice %195 {offsets = [0, 32], sizes = [2, 32], strides = [1, 1]} : vector<2x128xf32> to vector<2x32xf32>
    %208 = vector.extract_strided_slice %198 {offsets = [0, 32], sizes = [2, 32], strides = [1, 1]} : vector<2x128xf32> to vector<2x32xf32>
    %209 = arith.addf %207, %208 : vector<2x32xf32>
    %210 = arith.negf %209 : vector<2x32xf32>
    %211 = math.exp %210 : vector<2x32xf32>
    %cst_48 = arith.constant 1.000000e+00 : f32
    %212 = vector.broadcast %cst_48 : f32 to vector<2x32xf32>
    %213 = arith.addf %212, %211 : vector<2x32xf32>
    %214 = arith.divf %212, %213 : vector<2x32xf32>
    %215 = vector.extract_strided_slice %195 {offsets = [0, 64], sizes = [2, 32], strides = [1, 1]} : vector<2x128xf32> to vector<2x32xf32>
    %216 = vector.extract_strided_slice %198 {offsets = [0, 64], sizes = [2, 32], strides = [1, 1]} : vector<2x128xf32> to vector<2x32xf32>
    %217 = arith.mulf %206, %216 : vector<2x32xf32>
    %218 = arith.addf %215, %217 : vector<2x32xf32>
    %219 = math.tanh %218 : vector<2x32xf32>
    %cst_49 = arith.constant 1.000000e+00 : f32
    %220 = vector.broadcast %cst_49 : f32 to vector<2x32xf32>
    %221 = arith.subf %220, %214 : vector<2x32xf32>
    %222 = arith.mulf %221, %219 : vector<2x32xf32>
    %223 = arith.mulf %214, %194 : vector<2x32xf32>
    %224 = arith.addf %222, %223 : vector<2x32xf32>
    %c14 = arith.constant 14 : index
    %c0_50 = arith.constant 0 : index
    %225 = vector.load %arg10[%c14, %c0_50] : memref<16x128xf32, #tpu.memory_space<vmem>>, vector<2x128xf32>
    %226 = arith.truncf %224 : vector<2x32xf32> to vector<2x32xbf16>
    %cst_51 = arith.constant dense<0.000000e+00> : vector<2x128xf32>
    %227 = tpu.matmul %226, %0, %cst_51 {dimension_numbers = #tpu.dot_dimension_numbers<[1], [0], [0], [1], [0, 0, 1, 1], [], []>} : vector<2x32xbf16>, vector<32x128xbf16>, vector<2x128xf32> -> vector<2x128xf32>
    %228 = arith.addf %227, %3 : vector<2x128xf32>
    %229 = vector.extract_strided_slice %225 {offsets = [0, 0], sizes = [2, 32], strides = [1, 1]} : vector<2x128xf32> to vector<2x32xf32>
    %230 = vector.extract_strided_slice %228 {offsets = [0, 0], sizes = [2, 32], strides = [1, 1]} : vector<2x128xf32> to vector<2x32xf32>
    %231 = arith.addf %229, %230 : vector<2x32xf32>
    %232 = arith.negf %231 : vector<2x32xf32>
    %233 = math.exp %232 : vector<2x32xf32>
    %cst_52 = arith.constant 1.000000e+00 : f32
    %234 = vector.broadcast %cst_52 : f32 to vector<2x32xf32>
    %235 = arith.addf %234, %233 : vector<2x32xf32>
    %236 = arith.divf %234, %235 : vector<2x32xf32>
    %237 = vector.extract_strided_slice %225 {offsets = [0, 32], sizes = [2, 32], strides = [1, 1]} : vector<2x128xf32> to vector<2x32xf32>
    %238 = vector.extract_strided_slice %228 {offsets = [0, 32], sizes = [2, 32], strides = [1, 1]} : vector<2x128xf32> to vector<2x32xf32>
    %239 = arith.addf %237, %238 : vector<2x32xf32>
    %240 = arith.negf %239 : vector<2x32xf32>
    %241 = math.exp %240 : vector<2x32xf32>
    %cst_53 = arith.constant 1.000000e+00 : f32
    %242 = vector.broadcast %cst_53 : f32 to vector<2x32xf32>
    %243 = arith.addf %242, %241 : vector<2x32xf32>
    %244 = arith.divf %242, %243 : vector<2x32xf32>
    %245 = vector.extract_strided_slice %225 {offsets = [0, 64], sizes = [2, 32], strides = [1, 1]} : vector<2x128xf32> to vector<2x32xf32>
    %246 = vector.extract_strided_slice %228 {offsets = [0, 64], sizes = [2, 32], strides = [1, 1]} : vector<2x128xf32> to vector<2x32xf32>
    %247 = arith.mulf %236, %246 : vector<2x32xf32>
    %248 = arith.addf %245, %247 : vector<2x32xf32>
    %249 = math.tanh %248 : vector<2x32xf32>
    %cst_54 = arith.constant 1.000000e+00 : f32
    %250 = vector.broadcast %cst_54 : f32 to vector<2x32xf32>
    %251 = arith.subf %250, %244 : vector<2x32xf32>
    %252 = arith.mulf %251, %249 : vector<2x32xf32>
    %253 = arith.mulf %244, %224 : vector<2x32xf32>
    %254 = arith.addf %252, %253 : vector<2x32xf32>
    %c0_55 = arith.constant 0 : index
    %c0_56 = arith.constant 0 : index
    %255 = vector.load %arg8[%c0_55, %c0_56] : memref<2x32xf32, #tpu.memory_space<vmem>>, vector<2x32xf32>
    tpu.vector_store %arg8[%c0_55, %c0_56], %254 {strides = array<i32>} : memref<2x32xf32, #tpu.memory_space<vmem>>, vector<2x32xf32>,
    %256 = arith.truncf %44 : vector<2x32xf32> to vector<2x32xbf16>
    %c0_57 = arith.constant 0 : index
    %c0_58 = arith.constant 0 : index
    %257 = vector.load %arg6[%c0_57, %c0_58] : memref<32x128xbf16, #tpu.memory_space<vmem>>, vector<32x128xbf16>
    %cst_59 = arith.constant dense<0.000000e+00> : vector<2x128xf32>
    %258 = tpu.matmul %256, %257, %cst_59 {dimension_numbers = #tpu.dot_dimension_numbers<[1], [0], [0], [1], [0, 0, 1, 1], [], []>} : vector<2x32xbf16>, vector<32x128xbf16>, vector<2x128xf32> -> vector<2x128xf32>
    %c0_60 = arith.constant 0 : index
    %c0_61 = arith.constant 0 : index
    %259 = vector.load %arg7[%c0_60, %c0_61] : memref<1x128xf32, #tpu.memory_space<vmem>>, vector<1x128xf32>
    %260 = vector.broadcast %259 : vector<1x128xf32> to vector<2x128xf32>
    %261 = arith.addf %258, %260 : vector<2x128xf32>
    %cst_62 = arith.constant dense<0xFF800000> : vector<2xf32>
    %262 = vector.multi_reduction <maximumf>, %261, %cst_62 [1] : vector<2x128xf32> to vector<2xf32>
    %263 = vector.shape_cast %262 : vector<2xf32> to vector<2x1xf32>
    %264 = vector.broadcast %263 : vector<2x1xf32> to vector<2x128xf32>
    %265 = arith.subf %261, %264 : vector<2x128xf32>
    %266 = math.exp %265 : vector<2x128xf32>
    %cst_63 = arith.constant dense<0.000000e+00> : vector<2xf32>
    %267 = vector.multi_reduction <add>, %266, %cst_63 [1] : vector<2x128xf32> to vector<2xf32>
    %268 = vector.shape_cast %267 : vector<2xf32> to vector<2x1xf32>
    %269 = math.log %268 : vector<2x1xf32>
    %270 = arith.addf %269, %263 : vector<2x1xf32>
    %271 = vector.broadcast %270 : vector<2x1xf32> to vector<2x128xf32>
    %272 = arith.subf %261, %271 : vector<2x128xf32>
    %c0_64 = arith.constant 0 : index
    %c0_65 = arith.constant 0 : index
    %273 = vector.load %arg9[%c0_64, %c0_65] : memref<2x128xf32, #tpu.memory_space<vmem>>, vector<2x128xf32>
    tpu.vector_store %arg9[%c0_64, %c0_65], %272 {strides = array<i32>} : memref<2x128xf32, #tpu.memory_space<vmem>>, vector<2x128xf32>,
    return
  }
}

</mosaic_0001>

<llo_original>
// kernel: tpu_custom_call.1
$region0: #{tpu_custom_call.1}
  #allocation0 [shape = 'u32[]', space=smem, size = 0x4, offset = 0x4, fixed_abs, tag = 'smem constant byte address 0x4 - core index']
  #allocation1 [shape = 'u32[72,128]{1,0:T(1,128)}', space=vmem, size = 0x9000, scoped, tag = 'internal scratch']
  #allocation2 [shape = 'f32[16,128]{1,0:T(8,128)}', space=vmem, size = 0x2000, scoped, tag = 'scratch operand']
  #allocation3 [shape = 'f32[16,32]{1,0:T(8,128)}', space=vmem, size = 0x2000, scoped, tag = 'scratch operand']
  %s0 = inlined_call_operand.hbm [shape: f32[16,32], index: 0, kind: input, shape index: {}]
  %s1 = inlined_call_operand.hbm [shape: f32[2,32], index: 1, kind: input, shape index: {}]
  %s2 = inlined_call_operand.hbm [shape: bf16[32,128], index: 2, kind: input, shape index: {}]
  %s3 = inlined_call_operand.hbm [shape: bf16[32,128], index: 3, kind: input, shape index: {}]
  %s4 = inlined_call_operand.vmem [shape: f32[1,128], index: 4, kind: input, shape index: {}]
  %s5 = inlined_call_operand.vmem [shape: f32[1,128], index: 5, kind: input, shape index: {}]
  %s6 = inlined_call_operand.hbm [shape: bf16[32,128], index: 6, kind: input, shape index: {}]
  %s7 = inlined_call_operand.vmem [shape: f32[1,128], index: 7, kind: input, shape index: {}]
  %s8 = inlined_call_operand.hbm [shape: f32[2,32], index: 8, kind: output, shape index: {0}]
  %s9 = inlined_call_operand.hbm [shape: f32[2,128], index: 9, kind: output, shape index: {1}]
  %10 = xla_tuple %s8, %s9
  %s11 = sld [smem:[#allocation0]]
  $region70: #{tpu_custom_call.1} parent=0
    _
  %s13 = ssub.s32 1, %s11
  %s14 = scalar_select 0, %s13, %s11
  $region1: #{tpu_custom_call.1} parent=0
    #allocation4 [shape = 'u8[8192]{0}', space=vmem, size = 0x2000, scoped, tag = 'input window, operand 0, single buffered']
    #allocation5 [shape = 's32[1]{0}', space=sflag, size = 0x4, scoped, tag = 'scoped memory for tpu_custom_call.1']
    #allocation6 [shape = 's32[1]{0}', space=sflag, size = 0x4, scoped, tag = 'scoped memory for tpu_custom_call.1']
    #allocation7 [shape = 'u8[1024]{0}', space=vmem, size = 0x400, scoped, tag = 'input window, operand 1, single buffered']
    #allocation8 [shape = 's32[1]{0}', space=sflag, size = 0x4, scoped, tag = 'scoped memory for tpu_custom_call.1']
    #allocation9 [shape = 'u8[8192]{0}', space=vmem, size = 0x2000, scoped, tag = 'input window, operand 2, single buffered']
    #allocation10 [shape = 'u8[8192]{0}', space=vmem, size = 0x2000, scoped, tag = 'input window, operand 3, single buffered']
    #allocation11 [shape = 's32[1]{0}', space=sflag, size = 0x4, scoped, tag = 'scoped memory for tpu_custom_call.1']
    #allocation12 [shape = 'u8[8192]{0}', space=vmem, size = 0x2000, scoped, tag = 'input window, operand 6, single buffered']
    #allocation13 [shape = 'u8[1024]{0}', space=vmem, size = 0x400, scoped, tag = 'output window, operand 0, single buffered']
    #allocation14 [shape = 'u8[1024]{0}', space=vmem, size = 0x400, scoped, tag = 'output window, operand 1, single buffered']
    #allocation15 [shape = 's32[1]{0}', space=sflag, size = 0x4, scoped, tag = 'scoped memory for tpu_custom_call.1']
    %15 = vsyncpa [#allocation5], 0
    %16 = vsyncpa [#allocation8], 0
    %17 = vsyncpa [#allocation11], 0
    %18 = vsyncpa [#allocation6], 0
    %19 = vsyncpa [#allocation15], 0
    // Predicated region
    $region2: #{tpu_custom_call.1} parent=1 // pred_check
      _
    $region3: #{tpu_custom_call.1} parent=1 // pred_check_branch
      %21 = sbr.rel (0) target = $region5
    $region4: #{tpu_custom_call.1} parent=1 // pred_region
      %23 = vsyncadd [#allocation5], 0
      %s24 = sshll.u32 %s0, 4
      %s25 = int_to_ptr.hbm [resolvable:$true] %s24
      %s26 = sshll.u32 [#allocation4], 4
      %s27 = int_to_ptr.vmem [resolvable:$true] %s26
      %32 = dma.hbm_to_vmem [thread:$0]  %s25, 256, %s27, [#allocation5], 128, 128, 8
    $region5: #{tpu_custom_call.1} parent=1 // pred_fallthru
      _
    // Predicated region
    $region6: #{tpu_custom_call.1} parent=1 // pred_check
      _
    $region7: #{tpu_custom_call.1} parent=1 // pred_check_branch
      %34 = sbr.rel (0) target = $region9
    $region8: #{tpu_custom_call.1} parent=1 // pred_region
      %36 = vsyncadd [#allocation8], 0
      %s38 = sshll.u32 %s1, 4
      %s39 = int_to_ptr.hbm [resolvable:$true] %s38
      %s40 = sshll.u32 [#allocation7], 4
      %s41 = int_to_ptr.vmem [resolvable:$true] %s40
      %43 = dma.hbm_to_vmem [thread:$0]  %s39, 32, %s41, [#allocation8]
    $region9: #{tpu_custom_call.1} parent=1 // pred_fallthru
      _
    // Predicated region
    $region10: #{tpu_custom_call.1} parent=1 // pred_check
      _
    $region11: #{tpu_custom_call.1} parent=1 // pred_check_branch
      %45 = sbr.rel (0) target = $region13
    $region12: #{tpu_custom_call.1} parent=1 // pred_region
      %47 = vsyncadd [#allocation8], 0
      %s48 = sshll.u32 %s2, 4
      %s49 = int_to_ptr.hbm [resolvable:$true] %s48
      %s50 = sshll.u32 [#allocation9], 4
      %s51 = int_to_ptr.vmem [resolvable:$true] %s50
      %56 = dma.hbm_to_vmem [thread:$0]  %s49, 256, %s51, [#allocation8], 64, 64, 4
    $region13: #{tpu_custom_call.1} parent=1 // pred_fallthru
      _
    // Predicated region
    $region14: #{tpu_custom_call.1} parent=1 // pred_check
      _
    $region15: #{tpu_custom_call.1} parent=1 // pred_check_branch
      %58 = sbr.rel (0) target = $region17
    $region16: #{tpu_custom_call.1} parent=1 // pred_region
      %60 = vsyncadd [#allocation11], 0
      %s61 = sshll.u32 %s3, 4
      %s62 = int_to_ptr.hbm [resolvable:$true] %s61
      %s63 = sshll.u32 [#allocation10], 4
      %s64 = int_to_ptr.vmem [resolvable:$true] %s63
      %69 = dma.hbm_to_vmem [thread:$0]  %s62, 256, %s64, [#allocation11], 64, 64, 4
    $region17: #{tpu_custom_call.1} parent=1 // pred_fallthru
      _
    // Predicated region
    $region18: #{tpu_custom_call.1} parent=1 // pred_check
      _
    $region19: #{tpu_custom_call.1} parent=1 // pred_check_branch
      %71 = sbr.rel (0) target = $region21
    $region20: #{tpu_custom_call.1} parent=1 // pred_region
      _
    $region21: #{tpu_custom_call.1} parent=1 // pred_fallthru
      _
    // Predicated region
    $region22: #{tpu_custom_call.1} parent=1 // pred_check
      _
    $region23: #{tpu_custom_call.1} parent=1 // pred_check_branch
      %73 = sbr.rel (0) target = $region25
    $region24: #{tpu_custom_call.1} parent=1 // pred_region
      _
    $region25: #{tpu_custom_call.1} parent=1 // pred_fallthru
      _
    // Predicated region
    $region26: #{tpu_custom_call.1} parent=1 // pred_check
      _
    $region27: #{tpu_custom_call.1} parent=1 // pred_check_branch
      %75 = sbr.rel (0) target = $region29
    $region28: #{tpu_custom_call.1} parent=1 // pred_region
      %77 = vsyncadd [#allocation11], 0
      %s78 = sshll.u32 %s6, 4
      %s79 = int_to_ptr.hbm [resolvable:$true] %s78
      %s80 = sshll.u32 [#allocation12], 4
      %s81 = int_to_ptr.vmem [resolvable:$true] %s80
      %86 = dma.hbm_to_vmem [thread:$0]  %s79, 256, %s81, [#allocation11], 64, 64, 4
    $region29: #{tpu_custom_call.1} parent=1 // pred_fallthru
      _
    // Predicated region
    $region30: #{tpu_custom_call.1} parent=1 // pred_check
      _
    $region31: #{tpu_custom_call.1} parent=1 // pred_check_branch
      %88 = sbr.rel (0) target = $region33
    $region32: #{tpu_custom_call.1} parent=1 // pred_region
      _
    $region33: #{tpu_custom_call.1} parent=1 // pred_fallthru
      _
    // Predicated region
    $region34: #{tpu_custom_call.1} parent=1 // pred_check
      _
    $region35: #{tpu_custom_call.1} parent=1 // pred_check_branch
      %90 = sbr.rel (0) target = $region37
    $region36: #{tpu_custom_call.1} parent=1 // pred_region
      %92 = dma.done [#allocation5], 256
    $region37: #{tpu_custom_call.1} parent=1 // pred_fallthru
      _
    // Predicated region
    $region38: #{tpu_custom_call.1} parent=1 // pred_check
      _
    $region39: #{tpu_custom_call.1} parent=1 // pred_check_branch
      %94 = sbr.rel (0) target = $region41
    $region40: #{tpu_custom_call.1} parent=1 // pred_region
      %96 = dma.done [#allocation8], 32
    $region41: #{tpu_custom_call.1} parent=1 // pred_fallthru
      _
    // Predicated region
    $region42: #{tpu_custom_call.1} parent=1 // pred_check
      _
    $region43: #{tpu_custom_call.1} parent=1 // pred_check_branch
      %98 = sbr.rel (0) target = $region45
    $region44: #{tpu_custom_call.1} parent=1 // pred_region
      %100 = dma.done [#allocation8], 256
    $region45: #{tpu_custom_call.1} parent=1 // pred_fallthru
      _
    // Predicated region
    $region46: #{tpu_custom_call.1} parent=1 // pred_check
      _
    $region47: #{tpu_custom_call.1} parent=1 // pred_check_branch
      %102 = sbr.rel (0) target = $region49
    $region48: #{tpu_custom_call.1} parent=1 // pred_region
      %104 = dma.done [#allocation11], 256
    $region49: #{tpu_custom_call.1} parent=1 // pred_fallthru
      _
    // Predicated region
    $region50: #{tpu_custom_call.1} parent=1 // pred_check
      _
    $region51: #{tpu_custom_call.1} parent=1 // pred_check_branch
      %106 = sbr.rel (0) target = $region53
    $region52: #{tpu_custom_call.1} parent=1 // pred_region
      %108 = dma.done [#allocation11], 256
    $region53: #{tpu_custom_call.1} parent=1 // pred_fallthru
      _
    %v110 = vld [vmem:[#allocation10] sm:$0xf]
    %v111 = vld [vmem:[#allocation10 + $0x4] sm:$0xf]
    %v112 = vld [vmem:[#allocation10 + $0x8] sm:$0xf]
    %v113 = vld [vmem:[#allocation10 + $0xc] sm:$0xf]
    %v114 = vld [vmem:[%s5] sm:$0x1]
    %v116 = vperm.slane %v114, 0
    %v118 = vld [vmem:[#allocation7] sm:$0x3]
    %v119 = vld [vmem:[#allocation4] sm:$0xff]
    %v120 = vld [vmem:[#allocation4 + $0x8] sm:$0xff]
    %v121 = vmax.f32 %v119, 0.0
    %v122 = vmax.f32 %v120, 0.0
    %v123 = vpack.c.bf16 %v122, %v121
    %v124 = vld [vmem:[#allocation9] sm:$0xf]
    %v125 = vld [vmem:[#allocation9 + $0x4] sm:$0xf]
    %v126 = vld [vmem:[#allocation9 + $0x8] sm:$0xf]
    %v127 = vld [vmem:[#allocation9 + $0xc] sm:$0xf]
    %v128 = vld [vmem:[%s4] sm:$0x1]
    %v130 = vperm.slane %v128, 0
    %v136 = vunpack.c.l.b16 %v124
    %v137 = vunpack.c.l.b16 %v125
    %v138 = vunpack.c.l.b16 %v126
    %v139 = vunpack.c.l.b16 %v127
    %v140 = vpack.c.b16 %v137, %v136
    %v141 = vpack.c.b16 %v139, %v138
    %vm144 = vcmask 261120
    %v146 = vsel %vm144, %v123, 0
    %148 = vmatpush.bf16.msra.mxu0 0
    %149 = vmatpush.bf16.msra.mxu0 0
    %150 = vmatpush.bf16.msra.mxu0 0
    %151 = vmatpush.bf16.msra.mxu0 0
    %152 = vmatpush.bf16.msra.mxu0 0
    %153 = vmatpush.bf16.msra.mxu0 0
    %154 = vmatpush.bf16.msra.mxu0 %v141
    %155 = vmatpush.bf16.msra.mxu0 %v140
    %156 = vmatmul.bf16.gmra.mxu0 %v146
    %v157 = vpop.f32.mrf.mxu0
    %v158 = vadd.f32 %v130, %v157
    %v159 = vpop.f32.mrf.mxu0
    %v160 = vadd.f32 %v130, %v159
    %161 = vdwg.mxu0
    %162 = vst [vmem:[#allocation2] sm:$0xff] %v158
    %163 = vst [vmem:[#allocation2 + $0x8] sm:$0xff] %v160
    %v164 = vld [vmem:[#allocation2] sm:$0x3]
    %v165 = vpack.c.bf16 %v118, %v118
    %v170 = vunpack.c.l.b16 %v110
    %v171 = vunpack.c.l.b16 %v111
    %v172 = vunpack.c.l.b16 %v112
    %v173 = vunpack.c.l.b16 %v113
    %v174 = vpack.c.b16 %v171, %v170
    %v175 = vpack.c.b16 %v173, %v172
    %v179 = vsel %vm144, %v165, 0
    %181 = vmatpush.bf16.msra.mxu0 0
    %182 = vmatpush.bf16.msra.mxu0 0
    %183 = vmatpush.bf16.msra.mxu0 0
    %184 = vmatpush.bf16.msra.mxu0 0
    %185 = vmatpush.bf16.msra.mxu0 0
    %186 = vmatpush.bf16.msra.mxu0 0
    %187 = vmatpush.bf16.msra.mxu0 %v175
    %188 = vmatpush.bf16.msra.mxu0 %v174
    %189 = vmatmul.bf16.gmra.mxu0 %v179
    %v190 = vpop.f32.mrf.mxu0
    %v191 = vadd.f32 %v116, %v190
    %v192 = vpop.f32.mrf.mxu0
    %193 = vdwg.mxu0
    %v194 = vadd.f32 %v164, %v191
    %v195 = vxor.u32 %v194, 2147483648
    %v196 = vmul.f32 %v195, 1.442695
    %v197 = vpow.pop %v196
    %v198 = vadd.f32 %v197, 1.0
    %v199 = vrcp.pop %v198
    %v200 = vmul.f32 %v198, %v199
    %v201 = vsub.f32 1.0, %v200
    %v202 = vmul.f32 %v199, %v201
    %v203 = vadd.f32 %v199, %v202
    %vm204 = vweird.f32 %v198
    %vm205 = vweird.f32 %v199
    %vm206 = vmor %vm204, %vm205
    %v207 = vsel %vm206, %v199, %v203
    %v208 = vand.u32 2147483647, %v198
    %vm209 = vcmp.eq.f32.partialorder %v208, 8.507059e+37
    %v210 = vand.u32 %v198, 2147483648
    %v211 = vor.u32 1.1754944e-38, %v210
    %v212 = vsel %vm209, %v211, %v207
    %v213 = vmul.f32 1.0, %v212
    %215 = vrot.lane.b32.xlu0 %v191, 64
    %v216 = vpop.permute.xlu0 %215
    %v218 = vmul.f32 %v213, %v216
    %220 = vrot.lane.b32.xlu0 %v218, 64
    %v221 = vpop.permute.xlu0 %220
    %v223 = vadd.f32 %v164, %v221
    %v224 = vtanh.pop %v223
    %v225 = vsub.f32 1.0, %v213
    %227 = vrot.lane.b32.xlu0 %v224, 96
    %v228 = vpop.permute.xlu0 %227
    %v230 = vmul.f32 %v225, %v228
    %232 = vrot.lane.b32.xlu0 %v118, 32
    %v233 = vpop.permute.xlu0 %232
    %v235 = vmul.f32 %v213, %v233
    %v236 = vadd.f32 %v230, %v235
    %v237 = vld [vmem:[#allocation2 + $0x2] sm:$0x3]
    %v238 = vpack.c.bf16 %v236, %v236
    %240 = vrot.lane.b32.xlu0 %v238, 96
    %v241 = vpop.permute.xlu0 %240
    %v243 = vsel %vm144, %v241, 0
    %245 = vmatpush.bf16.msra.mxu0 0
    %246 = vmatpush.bf16.msra.mxu0 0
    %247 = vmatpush.bf16.msra.mxu0 0
    %248 = vmatpush.bf16.msra.mxu0 0
    %249 = vmatpush.bf16.msra.mxu0 0
    %250 = vmatpush.bf16.msra.mxu0 0
    %251 = vmatpush.bf16.msra.mxu0 %v175
    %252 = vmatpush.bf16.msra.mxu0 %v174
    %253 = vmatmul.bf16.gmra.mxu0 %v243
    %v254 = vpop.f32.mrf.mxu0
    %v255 = vadd.f32 %v116, %v254
    %v256 = vpop.f32.mrf.mxu0
    %257 = vdwg.mxu0
    %v258 = vadd.f32 %v237, %v255
    %v259 = vxor.u32 %v258, 2147483648
    %v260 = vmul.f32 %v259, 1.442695
    %v261 = vpow.pop %v260
    %v262 = vadd.f32 %v261, 1.0
    %v263 = vrcp.pop %v262
    %v264 = vmul.f32 %v262, %v263
    %v265 = vsub.f32 1.0, %v264
    %v266 = vmul.f32 %v263, %v265
    %v267 = vadd.f32 %v263, %v266
    %vm268 = vweird.f32 %v262
    %vm269 = vweird.f32 %v263
    %vm270 = vmor %vm268, %vm269
    %v271 = vsel %vm270, %v263, %v267
    %v272 = vand.u32 2147483647, %v262
    %vm273 = vcmp.eq.f32.partialorder %v272, 8.507059e+37
    %v274 = vand.u32 %v262, 2147483648
    %v275 = vor.u32 1.1754944e-38, %v274
    %v276 = vsel %vm273, %v275, %v271
    %v277 = vmul.f32 1.0, %v276
    %279 = vrot.lane.b32.xlu0 %v255, 64
    %v280 = vpop.permute.xlu0 %279
    %v282 = vmul.f32 %v277, %v280
    %284 = vrot.lane.b32.xlu0 %v282, 64
    %v285 = vpop.permute.xlu0 %284
    %v287 = vadd.f32 %v237, %v285
    %v288 = vtanh.pop %v287
    %v289 = vsub.f32 1.0, %v277
    %291 = vrot.lane.b32.xlu0 %v288, 96
    %v292 = vpop.permute.xlu0 %291
    %v294 = vmul.f32 %v289, %v292
    %v295 = vmul.f32 %v277, %v236
    %v296 = vadd.f32 %v294, %v295
    %v297 = vld [vmem:[#allocation2 + $0x4] sm:$0x3]
    %v298 = vpack.c.bf16 %v296, %v296
    %300 = vrot.lane.b32.xlu0 %v298, 96
    %v301 = vpop.permute.xlu0 %300
    %v303 = vsel %vm144, %v301, 0
    %305 = vmatpush.bf16.msra.mxu0 0
    %306 = vmatpush.bf16.msra.mxu0 0
    %307 = vmatpush.bf16.msra.mxu0 0
    %308 = vmatpush.bf16.msra.mxu0 0
    %309 = vmatpush.bf16.msra.mxu0 0
    %310 = vmatpush.bf16.msra.mxu0 0
    %311 = vmatpush.bf16.msra.mxu0 %v175
    %312 = vmatpush.bf16.msra.mxu0 %v174
    %313 = vmatmul.bf16.gmra.mxu0 %v303
    %v314 = vpop.f32.mrf.mxu0
    %v315 = vadd.f32 %v116, %v314
    %v316 = vpop.f32.mrf.mxu0
    %317 = vdwg.mxu0
    %v318 = vadd.f32 %v297, %v315
    %v319 = vxor.u32 %v318, 2147483648
    %v320 = vmul.f32 %v319, 1.442695
    %v321 = vpow.pop %v320
    %v322 = vadd.f32 %v321, 1.0
    %v323 = vrcp.pop %v322
    %v324 = vmul.f32 %v322, %v323
    %v325 = vsub.f32 1.0, %v324
    %v326 = vmul.f32 %v323, %v325
    %v327 = vadd.f32 %v323, %v326
    %vm328 = vweird.f32 %v322
    %vm329 = vweird.f32 %v323
    %vm330 = vmor %vm328, %vm329
    %v331 = vsel %vm330, %v323, %v327
    %v332 = vand.u32 2147483647, %v322
    %vm333 = vcmp.eq.f32.partialorder %v332, 8.507059e+37
    %v334 = vand.u32 %v322, 2147483648
    %v335 = vor.u32 1.1754944e-38, %v334
    %v336 = vsel %vm333, %v335, %v331
    %v337 = vmul.f32 1.0, %v336
    %339 = vrot.lane.b32.xlu0 %v315, 64
    %v340 = vpop.permute.xlu0 %339
    %v342 = vmul.f32 %v337, %v340
    %344 = vrot.lane.b32.xlu0 %v342, 64
    %v345 = vpop.permute.xlu0 %344
    %v347 = vadd.f32 %v297, %v345
    %v348 = vtanh.pop %v347
    %v349 = vsub.f32 1.0, %v337
    %351 = vrot.lane.b32.xlu0 %v348, 96
    %v352 = vpop.permute.xlu0 %351
    %v354 = vmul.f32 %v349, %v352
    %v355 = vmul.f32 %v337, %v296
    %v356 = vadd.f32 %v354, %v355
    %v357 = vld [vmem:[#allocation2 + $0x6] sm:$0x3]
    %v358 = vpack.c.bf16 %v356, %v356
    %360 = vrot.lane.b32.xlu0 %v358, 96
    %v361 = vpop.permute.xlu0 %360
    %v363 = vsel %vm144, %v361, 0
    %365 = vmatpush.bf16.msra.mxu0 0
    %366 = vmatpush.bf16.msra.mxu0 0
    %367 = vmatpush.bf16.msra.mxu0 0
    %368 = vmatpush.bf16.msra.mxu0 0
    %369 = vmatpush.bf16.msra.mxu0 0
    %370 = vmatpush.bf16.msra.mxu0 0
    %371 = vmatpush.bf16.msra.mxu0 %v175
    %372 = vmatpush.bf16.msra.mxu0 %v174
    %373 = vmatmul.bf16.gmra.mxu0 %v363
    %v374 = vpop.f32.mrf.mxu0
    %v375 = vadd.f32 %v116, %v374
    %v376 = vpop.f32.mrf.mxu0
    %377 = vdwg.mxu0
    %v378 = vadd.f32 %v357, %v375
    %v379 = vxor.u32 %v378, 2147483648
    %v380 = vmul.f32 %v379, 1.442695
    %v381 = vpow.pop %v380
    %v382 = vadd.f32 %v381, 1.0
    %v383 = vrcp.pop %v382
    %v384 = vmul.f32 %v382, %v383
    %v385 = vsub.f32 1.0, %v384
    %v386 = vmul.f32 %v383, %v385
    %v387 = vadd.f32 %v383, %v386
    %vm388 = vweird.f32 %v382
    %vm389 = vweird.f32 %v383
    %vm390 = vmor %vm388, %vm389
    %v391 = vsel %vm390, %v383, %v387
    %v392 = vand.u32 2147483647, %v382
    %vm393 = vcmp.eq.f32.partialorder %v392, 8.507059e+37
    %v394 = vand.u32 %v382, 2147483648
    %v395 = vor.u32 1.1754944e-38, %v394
    %v396 = vsel %vm393, %v395, %v391
    %v397 = vmul.f32 1.0, %v396
    %399 = vrot.lane.b32.xlu0 %v375, 64
    %v400 = vpop.permute.xlu0 %399
    %v402 = vmul.f32 %v397, %v400
    %404 = vrot.lane.b32.xlu0 %v402, 64
    %v405 = vpop.permute.xlu0 %404
    %v407 = vadd.f32 %v357, %v405
    %v408 = vtanh.pop %v407
    %v409 = vsub.f32 1.0, %v397
    %411 = vrot.lane.b32.xlu0 %v408, 96
    %v412 = vpop.permute.xlu0 %411
    %v414 = vmul.f32 %v409, %v412
    %v415 = vmul.f32 %v397, %v356
    %v416 = vadd.f32 %v414, %v415
    %v417 = vld [vmem:[#allocation2 + $0x8] sm:$0x3]
    %v418 = vpack.c.bf16 %v416, %v416
    %420 = vrot.lane.b32.xlu0 %v418, 96
    %v421 = vpop.permute.xlu0 %420
    %v423 = vsel %vm144, %v421, 0
    %425 = vmatpush.bf16.msra.mxu0 0
    %426 = vmatpush.bf16.msra.mxu0 0
    %427 = vmatpush.bf16.msra.mxu0 0
    %428 = vmatpush.bf16.msra.mxu0 0
    %429 = vmatpush.bf16.msra.mxu0 0
    %430 = vmatpush.bf16.msra.mxu0 0
    %431 = vmatpush.bf16.msra.mxu0 %v175
    %432 = vmatpush.bf16.msra.mxu0 %v174
    %433 = vmatmul.bf16.gmra.mxu0 %v423
    %v434 = vpop.f32.mrf.mxu0
    %v435 = vadd.f32 %v116, %v434
    %v436 = vpop.f32.mrf.mxu0
    %437 = vdwg.mxu0
    %v438 = vadd.f32 %v417, %v435
    %v439 = vxor.u32 %v438, 2147483648
    %v440 = vmul.f32 %v439, 1.442695
    %v441 = vpow.pop %v440
    %v442 = vadd.f32 %v441, 1.0
    %v443 = vrcp.pop %v442
    %v444 = vmul.f32 %v442, %v443
    %v445 = vsub.f32 1.0, %v444
    %v446 = vmul.f32 %v443, %v445
    %v447 = vadd.f32 %v443, %v446
    %vm448 = vweird.f32 %v442
    %vm449 = vweird.f32 %v443
    %vm450 = vmor %vm448, %vm449
    %v451 = vsel %vm450, %v443, %v447
    %v452 = vand.u32 2147483647, %v442
    %vm453 = vcmp.eq.f32.partialorder %v452, 8.507059e+37
    %v454 = vand.u32 %v442, 2147483648
    %v455 = vor.u32 1.1754944e-38, %v454
    %v456 = vsel %vm453, %v455, %v451
    %v457 = vmul.f32 1.0, %v456
    %459 = vrot.lane.b32.xlu0 %v435, 64
    %v460 = vpop.permute.xlu0 %459
    %v462 = vmul.f32 %v457, %v460
    %464 = vrot.lane.b32.xlu0 %v462, 64
    %v465 = vpop.permute.xlu0 %464
    %v467 = vadd.f32 %v417, %v465
    %v468 = vtanh.pop %v467
    %v469 = vsub.f32 1.0, %v457
    %471 = vrot.lane.b32.xlu0 %v468, 96
    %v472 = vpop.permute.xlu0 %471
    %v474 = vmul.f32 %v469, %v472
    %v475 = vmul.f32 %v457, %v416
    %v476 = vadd.f32 %v474, %v475
    %v477 = vld [vmem:[#allocation2 + $0xa] sm:$0x3]
    %v478 = vpack.c.bf16 %v476, %v476
    %480 = vrot.lane.b32.xlu0 %v478, 96
    %v481 = vpop.permute.xlu0 %480
    %v483 = vsel %vm144, %v481, 0
    %485 = vmatpush.bf16.msra.mxu0 0
    %486 = vmatpush.bf16.msra.mxu0 0
    %487 = vmatpush.bf16.msra.mxu0 0
    %488 = vmatpush.bf16.msra.mxu0 0
    %489 = vmatpush.bf16.msra.mxu0 0
    %490 = vmatpush.bf16.msra.mxu0 0
    %491 = vmatpush.bf16.msra.mxu0 %v175
    %492 = vmatpush.bf16.msra.mxu0 %v174
    %493 = vmatmul.bf16.gmra.mxu0 %v483
    %v494 = vpop.f32.mrf.mxu0
    %v495 = vadd.f32 %v116, %v494
    %v496 = vpop.f32.mrf.mxu0
    %497 = vdwg.mxu0
    %v498 = vadd.f32 %v477, %v495
    %v499 = vxor.u32 %v498, 2147483648
    %v500 = vmul.f32 %v499, 1.442695
    %v501 = vpow.pop %v500
    %v502 = vadd.f32 %v501, 1.0
    %v503 = vrcp.pop %v502
    %v504 = vmul.f32 %v502, %v503
    %v505 = vsub.f32 1.0, %v504
    %v506 = vmul.f32 %v503, %v505
    %v507 = vadd.f32 %v503, %v506
    %vm508 = vweird.f32 %v502
    %vm509 = vweird.f32 %v503
    %vm510 = vmor %vm508, %vm509
    %v511 = vsel %vm510, %v503, %v507
    %v512 = vand.u32 2147483647, %v502
    %vm513 = vcmp.eq.f32.partialorder %v512, 8.507059e+37
    %v514 = vand.u32 %v502, 2147483648
    %v515 = vor.u32 1.1754944e-38, %v514
    %v516 = vsel %vm513, %v515, %v511
    %v517 = vmul.f32 1.0, %v516
    %519 = vrot.lane.b32.xlu0 %v495, 64
    %v520 = vpop.permute.xlu0 %519
    %v522 = vmul.f32 %v517, %v520
    %524 = vrot.lane.b32.xlu0 %v522, 64
    %v525 = vpop.permute.xlu0 %524
    %v527 = vadd.f32 %v477, %v525
    %v528 = vtanh.pop %v527
    %v529 = vsub.f32 1.0, %v517
    %531 = vrot.lane.b32.xlu0 %v528, 96
    %v532 = vpop.permute.xlu0 %531
    %v534 = vmul.f32 %v529, %v532
    %v535 = vmul.f32 %v517, %v476
    %v536 = vadd.f32 %v534, %v535
    %v537 = vld [vmem:[#allocation2 + $0xc] sm:$0x3]
    %v538 = vpack.c.bf16 %v536, %v536
    %540 = vrot.lane.b32.xlu0 %v538, 96
    %v541 = vpop.permute.xlu0 %540
    %v543 = vsel %vm144, %v541, 0
    %545 = vmatpush.bf16.msra.mxu0 0
    %546 = vmatpush.bf16.msra.mxu0 0
    %547 = vmatpush.bf16.msra.mxu0 0
    %548 = vmatpush.bf16.msra.mxu0 0
    %549 = vmatpush.bf16.msra.mxu0 0
    %550 = vmatpush.bf16.msra.mxu0 0
    %551 = vmatpush.bf16.msra.mxu0 %v175
    %552 = vmatpush.bf16.msra.mxu0 %v174
    %553 = vmatmul.bf16.gmra.mxu0 %v543
    %v554 = vpop.f32.mrf.mxu0
    %v555 = vadd.f32 %v116, %v554
    %v556 = vpop.f32.mrf.mxu0
    %557 = vdwg.mxu0
    %v558 = vadd.f32 %v537, %v555
    %v559 = vxor.u32 %v558, 2147483648
    %v560 = vmul.f32 %v559, 1.442695
    %v561 = vpow.pop %v560
    %v562 = vadd.f32 %v561, 1.0
    %v563 = vrcp.pop %v562
    %v564 = vmul.f32 %v562, %v563
    %v565 = vsub.f32 1.0, %v564
    %v566 = vmul.f32 %v563, %v565
    %v567 = vadd.f32 %v563, %v566
    %vm568 = vweird.f32 %v562
    %vm569 = vweird.f32 %v563
    %vm570 = vmor %vm568, %vm569
    %v571 = vsel %vm570, %v563, %v567
    %v572 = vand.u32 2147483647, %v562
    %vm573 = vcmp.eq.f32.partialorder %v572, 8.507059e+37
    %v574 = vand.u32 %v562, 2147483648
    %v575 = vor.u32 1.1754944e-38, %v574
    %v576 = vsel %vm573, %v575, %v571
    %v577 = vmul.f32 1.0, %v576
    %579 = vrot.lane.b32.xlu0 %v555, 64
    %v580 = vpop.permute.xlu0 %579
    %v582 = vmul.f32 %v577, %v580
    %584 = vrot.lane.b32.xlu0 %v582, 64
    %v585 = vpop.permute.xlu0 %584
    %v587 = vadd.f32 %v537, %v585
    %v588 = vtanh.pop %v587
    %v589 = vsub.f32 1.0, %v577
    %591 = vrot.lane.b32.xlu0 %v588, 96
    %v592 = vpop.permute.xlu0 %591
    %v594 = vmul.f32 %v589, %v592
    %v595 = vmul.f32 %v577, %v536
    %v596 = vadd.f32 %v594, %v595
    %v597 = vld [vmem:[#allocation2 + $0xe] sm:$0x3]
    %v598 = vpack.c.bf16 %v596, %v596
    %600 = vrot.lane.b32.xlu0 %v598, 96
    %v601 = vpop.permute.xlu0 %600
    %v603 = vsel %vm144, %v601, 0
    %605 = vmatpush.bf16.msra.mxu0 0
    %606 = vmatpush.bf16.msra.mxu0 0
    %607 = vmatpush.bf16.msra.mxu0 0
    %608 = vmatpush.bf16.msra.mxu0 0
    %609 = vmatpush.bf16.msra.mxu0 0
    %610 = vmatpush.bf16.msra.mxu0 0
    %611 = vmatpush.bf16.msra.mxu0 %v175
    %612 = vmatpush.bf16.msra.mxu0 %v174
    %613 = vmatmul.bf16.gmra.mxu0 %v603
    %v614 = vpop.f32.mrf.mxu0
    %v615 = vadd.f32 %v116, %v614
    %v616 = vpop.f32.mrf.mxu0
    %617 = vdwg.mxu0
    %v618 = vadd.f32 %v597, %v615
    %v619 = vxor.u32 %v618, 2147483648
    %v620 = vmul.f32 %v619, 1.442695
    %v621 = vpow.pop %v620
    %v622 = vadd.f32 %v621, 1.0
    %v623 = vrcp.pop %v622
    %v624 = vmul.f32 %v622, %v623
    %v625 = vsub.f32 1.0, %v624
    %v626 = vmul.f32 %v623, %v625
    %v627 = vadd.f32 %v623, %v626
    %vm628 = vweird.f32 %v622
    %vm629 = vweird.f32 %v623
    %vm630 = vmor %vm628, %vm629
    %v631 = vsel %vm630, %v623, %v627
    %v632 = vand.u32 2147483647, %v622
    %vm633 = vcmp.eq.f32.partialorder %v632, 8.507059e+37
    %v634 = vand.u32 %v622, 2147483648
    %v635 = vor.u32 1.1754944e-38, %v634
    %v636 = vsel %vm633, %v635, %v631
    %v637 = vmul.f32 1.0, %v636
    %639 = vrot.lane.b32.xlu0 %v615, 64
    %v640 = vpop.permute.xlu0 %639
    %v642 = vmul.f32 %v637, %v640
    %644 = vrot.lane.b32.xlu0 %v642, 64
    %v645 = vpop.permute.xlu0 %644
    %v647 = vadd.f32 %v597, %v645
    %v648 = vtanh.pop %v647
    %v649 = vsub.f32 1.0, %v637
    %651 = vrot.lane.b32.xlu0 %v648, 96
    %v652 = vpop.permute.xlu0 %651
    %v654 = vmul.f32 %v649, %v652
    %v655 = vmul.f32 %v637, %v596
    %v656 = vadd.f32 %v654, %v655
    %658 = vrot.lane.b32.xlu0 %v656, 96
    %v659 = vpop.permute.xlu0 %658
    %vm661 = vcmask 254976
    %662 = vst.msk [vmem:[#allocation13] sm:$0x3] %vm661, %v659
    %v663 = vld [vmem:[#allocation12] sm:$0xf]
    %v664 = vld [vmem:[#allocation12 + $0x4] sm:$0xf]
    %v665 = vld [vmem:[#allocation12 + $0x8] sm:$0xf]
    %v666 = vld [vmem:[#allocation12 + $0xc] sm:$0xf]
    %v667 = vld [vmem:[%s7] sm:$0x1]
    %v669 = vperm.slane %v667, 0
    %v675 = vunpack.c.l.b16 %v663
    %v676 = vunpack.c.l.b16 %v664
    %v677 = vunpack.c.l.b16 %v665
    %v678 = vunpack.c.l.b16 %v666
    %v679 = vpack.c.b16 %v676, %v675
    %v680 = vpack.c.b16 %v678, %v677
    %683 = vmatpush.bf16.msra.mxu0 0
    %684 = vmatpush.bf16.msra.mxu0 0
    %685 = vmatpush.bf16.msra.mxu0 0
    %686 = vmatpush.bf16.msra.mxu0 0
    %687 = vmatpush.bf16.msra.mxu0 0
    %688 = vmatpush.bf16.msra.mxu0 0
    %689 = vmatpush.bf16.msra.mxu0 %v680
    %690 = vmatpush.bf16.msra.mxu0 %v679
    %691 = vmatmul.bf16.gmra.mxu0 %v243
    %v692 = vpop.f32.mrf.mxu0
    %v693 = vadd.f32 %v669, %v692
    %v694 = vpop.f32.mrf.mxu0
    %695 = vdwg.mxu0
    %vm696 = vcmask 1041408
    %v697 = vsel %vm696, %v693, -inf
    %698 = vmax.xlane.f32.xlu0 %v697
    %v699 = vpop.xlane.xlu0 %698
    %v700 = vsub.f32 %v693, %v699
    %v701 = vmul.f32 %v700, 1.442695
    %v702 = vpow.pop %v701
    %v703 = vsel %vm696, %v702, 0.0
    %704 = vadd.xlane.f32.xlu0 %v703
    %v705 = vpop.xlane.xlu0 %704
    %v706 = vlog2.pop %v705
    %v707 = vmul.f32 %v706, 0.6931472
    %v708 = vadd.f32 %v707, %v699
    %v709 = vsub.f32 %v693, %v708
    %710 = vst [vmem:[#allocation14] sm:$0x3] %v709
    // Predicated region
    $region54: #{tpu_custom_call.1} parent=1 // pred_check
      _
    $region55: #{tpu_custom_call.1} parent=1 // pred_check_branch
      %712 = sbr.rel (0) target = $region57
    $region56: #{tpu_custom_call.1} parent=1 // pred_region
      %714 = vsyncadd [#allocation6], 0
      %s716 = sshll.u32 [#allocation13], 4
      %s717 = int_to_ptr.vmem [resolvable:$true] %s716
      %s718 = sshll.u32 %s8, 4
      %s719 = int_to_ptr.hbm [resolvable:$true] %s718
      %721 = dma.vmem_to_hbm [thread:$0]  %s717, 32, %s719, [#allocation6]
    $region57: #{tpu_custom_call.1} parent=1 // pred_fallthru
      _
    // Predicated region
    $region58: #{tpu_custom_call.1} parent=1 // pred_check
      _
    $region59: #{tpu_custom_call.1} parent=1 // pred_check_branch
      %723 = sbr.rel (0) target = $region61
    $region60: #{tpu_custom_call.1} parent=1 // pred_region
      %725 = vsyncadd [#allocation15], 0
      %s727 = sshll.u32 [#allocation14], 4
      %s728 = int_to_ptr.vmem [resolvable:$true] %s727
      %s729 = sshll.u32 %s9, 4
      %s730 = int_to_ptr.hbm [resolvable:$true] %s729
      %732 = dma.vmem_to_hbm [thread:$0]  %s728, 32, %s730, [#allocation15]
    $region61: #{tpu_custom_call.1} parent=1 // pred_fallthru
      _
    // Predicated region
    $region62: #{tpu_custom_call.1} parent=1 // pred_check
      _
    $region63: #{tpu_custom_call.1} parent=1 // pred_check_branch
      %734 = sbr.rel (0) target = $region65
    $region64: #{tpu_custom_call.1} parent=1 // pred_region
      %736 = dma.done [#allocation6], 32
    $region65: #{tpu_custom_call.1} parent=1 // pred_fallthru
      _
    // Predicated region
    $region66: #{tpu_custom_call.1} parent=1 // pred_check
      _
    $region67: #{tpu_custom_call.1} parent=1 // pred_check_branch
      %738 = sbr.rel (0) target = $region69
    $region68: #{tpu_custom_call.1} parent=1 // pred_region
      %740 = dma.done [#allocation15], 32
    $region69: #{tpu_custom_call.1} parent=1 // pred_fallthru
      _
    %741 = vsyncpa [#allocation5], 1
    %742 = vsyncpa [#allocation8], 1
    %743 = vsyncpa [#allocation11], 1
    %744 = vsyncpa [#allocation6], 1
    %745 = vsyncpa [#allocation15], 1

</llo_original>
